<compile_context>
chip_gen: v6e
topology: v6e:2x2x1
jax: 0.10.0
libtpu: 0.0.40
codegen_flags: <defaults>
</compile_context>

<pallas_src>
import functools

import numpy as np
import jax
import jax.numpy as jnp
from jax.experimental import pallas as pl
from jax.experimental.pallas import tpu as pltpu

EPS = 1e-06
CONTENT_FEATURE_DISTANCE = 'L2'

_LANES = 128
_MIN_TILE = 8 * _LANES          # (8, 128) minimum f32 tile
_DEFAULT_BLOCK_ROWS = 256       # 256 x 128 f32 = 128 KiB per input block


def _mse_kernel(x_ref, t_ref, loss_ref, acc_ref, *, inv_n):
    """Accumulates sum((x - t)^2) over the row-tiled grid; mean at the end."""
    i = pl.program_id(0)

    @pl.when(i == 0)
    def _init():
        acc_ref[...] = jnp.zeros_like(acc_ref)

    d = x_ref[...] - t_ref[...]
    acc_ref[...] += jnp.sum(d * d, keepdims=True)        # (1, 1)

    @pl.when(i == pl.num_programs(0) - 1)
    def _finalize():
        loss_ref[...] = acc_ref[...] * inv_n


def _cosine_kernel(x_ref, t_ref, loss_ref, xy_ref, xx_ref, tt_ref):
    """1 - <x,t> / (||x|| * ||t|| + EPS) over the flattened tensors."""
    i = pl.program_id(0)

    @pl.when(i == 0)
    def _init():
        xy_ref[...] = jnp.zeros_like(xy_ref)
        xx_ref[...] = jnp.zeros_like(xx_ref)
        tt_ref[...] = jnp.zeros_like(tt_ref)

    x = x_ref[...]
    t = t_ref[...]
    xy_ref[...] += jnp.sum(x * t, keepdims=True)
    xx_ref[...] += jnp.sum(x * x, keepdims=True)
    tt_ref[...] += jnp.sum(t * t, keepdims=True)

    @pl.when(i == pl.num_programs(0) - 1)
    def _finalize():
        denom = jnp.sqrt(xx_ref[...]) * jnp.sqrt(tt_ref[...]) + EPS
        loss_ref[...] = 1.0 - xy_ref[...] / denom


def _pack_lane_dense(a, block_rows):
    """Flatten -> zero-pad -> reshape to a lane-dense (rows, 128) f32 slab."""
    n = a.size
    flat = a.reshape(-1).astype(jnp.float32)
    chunk = block_rows * _LANES
    if n <= chunk:
        pad_to = -(-n // _MIN_TILE) * _MIN_TILE        # single grid step
    else:
        pad_to = -(-n // chunk) * chunk                # whole number of blocks
    flat = jnp.pad(flat, (0, pad_to - n))
    return flat.reshape(pad_to // _LANES, _LANES)


def content_loss_forward(x, target, distance=CONTENT_FEATURE_DISTANCE,
                         block_rows=_DEFAULT_BLOCK_ROWS):
    """JAX wrapper reproducing ContentLoss.forward.

    Returns (input, loss): the module returns `input` unchanged and stores the
    loss on `self.loss`, which we return explicitly instead.
    """
    assert x.shape == target.shape, "input/target shape mismatch"
    n = int(np.prod(x.shape))

    xm = _pack_lane_dense(x, block_rows)
    tm = _pack_lane_dense(target, block_rows)
    rows = xm.shape[0]
    br = min(block_rows, rows)
    grid = (rows // br,)

    if distance == 'L2':
        kernel = functools.partial(_mse_kernel, inv_n=1.0 / n)
        scratch = [pltpu.VMEM((1, 1), jnp.float32)]
    elif distance == 'COSINE':
        kernel = _cosine_kernel
        scratch = [pltpu.VMEM((1, 1), jnp.float32),
                   pltpu.VMEM((1, 1), jnp.float32),
                   pltpu.VMEM((1, 1), jnp.float32)]
    else:
        raise NotImplementedError(distance)

    loss = pl.pallas_call(
        kernel,
        out_shape=jax.ShapeDtypeStruct((1, 1), jnp.float32),
        grid=grid,
        in_specs=[
            pl.BlockSpec((br, _LANES), lambda i: (i, 0)),   # input block
            pl.BlockSpec((br, _LANES), lambda i: (i, 0)),   # target block
        ],
        out_specs=pl.BlockSpec((1, 1), lambda i: (0, 0)),   # resident scalar
        scratch_shapes=scratch,
        compiler_params=pltpu.CompilerParams(
            dimension_semantics=("arbitrary",)),             # reduction axis
    )(xm, tm)

    # ContentLoss.forward returns its input unchanged (identity passthrough).
    return x, loss[0, 0]


if __name__ == "__main__":
    key = jax.random.PRNGKey(0)
    kx, kt = jax.random.split(key)

    # Shapes consistent with a feature map fed to ContentLoss:
    # batch=2, channels=4, spatial=16x16.
    x = jax.random.uniform(kx, (2, 4, 16, 16), dtype=jnp.float32)
    target = jax.random.uniform(kt, (2, 4, 16, 16), dtype=jnp.float32)

    # --- L2 (module default) -------------------------------------------------
    out, loss = content_loss_forward(x, target)
    out = jax.block_until_ready(out)
    loss = jax.block_until_ready(loss)

    ref_loss = np.mean((np.asarray(x) - np.asarray(target)) ** 2)
    np.testing.assert_allclose(np.asarray(loss), ref_loss, rtol=1e-5, atol=1e-6)
    np.testing.assert_allclose(np.asarray(out), np.asarray(x))

    # --- COSINE branch (also part of the module) -----------------------------
    _, closs = content_loss_forward(x, target, distance='COSINE')
    closs = jax.block_until_ready(closs)
    xf = np.asarray(x).reshape(-1)
    tf = np.asarray(target).reshape(-1)
    ref_cos = 1.0 - (xf * tf).sum() / (np.linalg.norm(xf) * np.linalg.norm(tf) + EPS)
    np.testing.assert_allclose(np.asarray(closs), ref_cos, rtol=1e-5, atol=1e-6)

    # --- larger input: exercises the multi-step accumulator path -------------
    kx2, kt2 = jax.random.split(jax.random.PRNGKey(1))
    xb = jax.random.uniform(kx2, (2, 4, 128, 128), dtype=jnp.float32)
    tb = jax.random.uniform(kt2, (2, 4, 128, 128), dtype=jnp.float32)
    _, loss_b = content_loss_forward(xb, tb)
    loss_b = jax.block_until_ready(loss_b)
    ref_b = np.mean((np.asarray(xb) - np.asarray(tb)) ** 2)
    np.testing.assert_allclose(np.asarray(loss_b), ref_b, rtol=1e-5, atol=1e-6)

    print("KERNEL_OK")
</pallas_src>

<mosaic_0001>
module attributes {stable_mosaic.version = 11 : i64} {
  func.func @_mse_kernel(%arg0: i32, %arg1: memref<16x128xf32, #tpu.memory_space<vmem>>, %arg2: memref<16x128xf32, #tpu.memory_space<vmem>>, %arg3: memref<1x1xf32, #tpu.memory_space<vmem>>, %arg4: memref<1x1xf32, #tpu.memory_space<vmem>>) attributes {dimension_semantics = [#tpu.dimension_semantics<arbitrary>], iteration_bounds = array<i64: 1>, scalar_prefetch = 0 : i64, scratch_operands = 1 : i64, tpu.core_type = #tpu.core_type<tc>, window_params = [{transform_indices = @transform_0, window_bounds = array<i64: 16, 128>}, {transform_indices = @transform_1, window_bounds = array<i64: 16, 128>}, {pipeline_mode = #tpu.pipeline_mode<synchronous>, transform_indices = @transform_2, window_bounds = array<i64: 1, 1>}]} {
    %c0_i32 = arith.constant 0 : i32
    %0 = arith.cmpi eq, %arg0, %c0_i32 : i32
    %1 = arith.extui %0 : i1 to i32
    %c0_i32_0 = arith.constant 0 : i32
    %2 = arith.cmpi ne, %1, %c0_i32_0 : i32
    scf.if %2 {
      %cst_10 = arith.constant 0.000000e+00 : f32
      %18 = vector.broadcast %cst_10 : f32 to vector<1x1xf32>
      %c0_11 = arith.constant 0 : index
      %c0_12 = arith.constant 0 : index
      %19 = vector.load %arg4[%c0_11, %c0_12] : memref<1x1xf32, #tpu.memory_space<vmem>>, vector<1x1xf32>
      tpu.vector_store %arg4[%c0_11, %c0_12], %18 {strides = array<i32>} : memref<1x1xf32, #tpu.memory_space<vmem>>, vector<1x1xf32>,
    } else {
    }
    %c0 = arith.constant 0 : index
    %c0_1 = arith.constant 0 : index
    %3 = vector.load %arg1[%c0, %c0_1] : memref<16x128xf32, #tpu.memory_space<vmem>>, vector<16x128xf32>
    %c0_2 = arith.constant 0 : index
    %c0_3 = arith.constant 0 : index
    %4 = vector.load %arg2[%c0_2, %c0_3] : memref<16x128xf32, #tpu.memory_space<vmem>>, vector<16x128xf32>
    %5 = arith.subf %3, %4 : vector<16x128xf32>
    %c0_4 = arith.constant 0 : index
    %c0_5 = arith.constant 0 : index
    %6 = vector.load %arg4[%c0_4, %c0_5] : memref<1x1xf32, #tpu.memory_space<vmem>>, vector<1x1xf32>
    %7 = arith.mulf %5, %5 : vector<16x128xf32>
    %8 = vector.shape_cast %7 : vector<16x128xf32> to vector<1x16x128xf32>
    %cst = arith.constant dense<0.000000e+00> : vector<1xf32>
    %9 = vector.multi_reduction <add>, %8, %cst [1, 2] : vector<1x16x128xf32> to vector<1xf32>
    %10 = vector.shape_cast %9 : vector<1xf32> to vector<1x1x1xf32>
    %11 = vector.extract %10[0, 0, 0] : f32 from vector<1x1x1xf32>
    %12 = vector.broadcast %11 : f32 to vector<1x1xf32>
    %13 = arith.addf %6, %12 : vector<1x1xf32>
    %c0_6 = arith.constant 0 : index
    %c0_7 = arith.constant 0 : index
    %14 = vector.load %arg4[%c0_6, %c0_7] : memref<1x1xf32, #tpu.memory_space<vmem>>, vector<1x1xf32>
    tpu.vector_store %arg4[%c0_6, %c0_7], %13 {strides = array<i32>} : memref<1x1xf32, #tpu.memory_space<vmem>>, vector<1x1xf32>,
    %c0_i32_8 = arith.constant 0 : i32
    %15 = arith.cmpi eq, %arg0, %c0_i32_8 : i32
    %16 = arith.extui %15 : i1 to i32
    %c0_i32_9 = arith.constant 0 : i32
    %17 = arith.cmpi ne, %16, %c0_i32_9 : i32
    scf.if %17 {
      %c0_10 = arith.constant 0 : index
      %c0_11 = arith.constant 0 : index
      %18 = vector.load %arg4[%c0_10, %c0_11] : memref<1x1xf32, #tpu.memory_space<vmem>>, vector<1x1xf32>
      %cst_12 = arith.constant 4.8828125E-4 : f32
      %19 = vector.broadcast %cst_12 : f32 to vector<1x1xf32>
      %20 = arith.mulf %18, %19 : vector<1x1xf32>
      %c0_13 = arith.constant 0 : index
      %c0_14 = arith.constant 0 : index
      %21 = vector.load %arg3[%c0_13, %c0_14] : memref<1x1xf32, #tpu.memory_space<vmem>>, vector<1x1xf32>
      tpu.vector_store %arg3[%c0_13, %c0_14], %20 {strides = array<i32>} : memref<1x1xf32, #tpu.memory_space<vmem>>, vector<1x1xf32>,
    } else {
    }
    return
  }
  func.func @transform_0(%arg0: i32) -> (i32, i32) {
    %c0_i32 = arith.constant 0 : i32
    %c0_i32_0 = arith.constant 0 : i32
    return %arg0, %c0_i32 : i32, i32
  }
  func.func @transform_1(%arg0: i32) -> (i32, i32) {
    %c0_i32 = arith.constant 0 : i32
    %c0_i32_0 = arith.constant 0 : i32
    return %arg0, %c0_i32 : i32, i32
  }
  func.func @transform_2(%arg0: i32) -> (i32, i32) {
    %c0_i32 = arith.constant 0 : i32
    %c0_i32_0 = arith.constant 0 : i32
    %c0_i32_1 = arith.constant 0 : i32
    return %c0_i32, %c0_i32_0 : i32, i32
  }
}

</mosaic_0001>

<llo_original>
// kernel: tpu_custom_call.1
$region0: #{tpu_custom_call.1}
  #allocation0 [shape = 'u32[]', space=smem, size = 0x4, offset = 0x4, fixed_abs, tag = 'smem constant byte address 0x4 - core index']
  #allocation1 [shape = 'u32[144,128]{1,0:T(1,128)}', space=vmem, size = 0x12000, scoped, tag = 'internal scratch']
  #allocation2 [shape = 'f32[1,1]{1,0:T(1,128)}', space=vmem, size = 0x200, scoped, tag = 'scratch operand']
  %s0 = inlined_call_operand.hbm [shape: f32[16,128], index: 0, kind: input, shape index: {}]
  %s1 = inlined_call_operand.hbm [shape: f32[16,128], index: 1, kind: input, shape index: {}]
  %s2 = inlined_call_operand.hbm [shape: f32[1,1], index: 2, kind: output, shape index: {}]
  %s3 = sld [smem:[#allocation0]]
  $region34: #{tpu_custom_call.1} parent=0
    _
  %s5 = ssub.s32 1, %s3
  %s6 = scalar_select 0, %s5, %s3
  $region1: #{tpu_custom_call.1} parent=0
    #allocation3 [shape = 'u8[8192]{0}', space=vmem, size = 0x2000, scoped, tag = 'input window, operand 0, single buffered']
    #allocation4 [shape = 's32[1]{0}', space=sflag, size = 0x4, scoped, tag = 'scoped memory for tpu_custom_call.1']
    #allocation5 [shape = 's32[1]{0}', space=sflag, size = 0x4, scoped, tag = 'scoped memory for tpu_custom_call.1']
    #allocation6 [shape = 'u8[8192]{0}', space=vmem, size = 0x2000, scoped, tag = 'input window, operand 1, single buffered']
    #allocation7 [shape = 's32[1]{0}', space=sflag, size = 0x4, scoped, tag = 'scoped memory for tpu_custom_call.1']
    #allocation8 [shape = 'u8[512]{0}', space=vmem, size = 0x400, scoped, tag = 'output window, operand 0, single buffered']
    %7 = vsyncpa [#allocation4], 0
    %8 = vsyncpa [#allocation7], 0
    %9 = vsyncpa [#allocation5], 0
    // Predicated region
    $region2: #{tpu_custom_call.1} parent=1 // pred_check
      _
    $region3: #{tpu_custom_call.1} parent=1 // pred_check_branch
      %11 = sbr.rel (0) target = $region5
    $region4: #{tpu_custom_call.1} parent=1 // pred_region
      %s13 = ssub.s32 256, 256
      %14 = vsyncadd [#allocation4], %s13
      %s15 = sshll.u32 [#allocation3], 4
      %s16 = int_to_ptr.vmem [resolvable:$true] %s15
      %21 = dma.hbm_to_vmem [thread:$0]  %s0, 256, %s16, [#allocation4], 128, 128, 8
    $region5: #{tpu_custom_call.1} parent=1 // pred_fallthru
      _
    // Predicated region
    $region6: #{tpu_custom_call.1} parent=1 // pred_check
      _
    $region7: #{tpu_custom_call.1} parent=1 // pred_check_branch
      %23 = sbr.rel (0) target = $region9
    $region8: #{tpu_custom_call.1} parent=1 // pred_region
      %s25 = ssub.s32 256, 256
      %26 = vsyncadd [#allocation7], %s25
      %s27 = sshll.u32 [#allocation6], 4
      %s28 = int_to_ptr.vmem [resolvable:$true] %s27
      %33 = dma.hbm_to_vmem [thread:$0]  %s1, 256, %s28, [#allocation7], 128, 128, 8
    $region9: #{tpu_custom_call.1} parent=1 // pred_fallthru
      _
    // Predicated region
    $region10: #{tpu_custom_call.1} parent=1 // pred_check
      _
    $region11: #{tpu_custom_call.1} parent=1 // pred_check_branch
      %35 = sbr.rel (0) target = $region13
    $region12: #{tpu_custom_call.1} parent=1 // pred_region
      %36 = dma.done [#allocation4], 256
    $region13: #{tpu_custom_call.1} parent=1 // pred_fallthru
      _
    // Predicated region
    $region14: #{tpu_custom_call.1} parent=1 // pred_check
      _
    $region15: #{tpu_custom_call.1} parent=1 // pred_check_branch
      %38 = sbr.rel (0) target = $region17
    $region16: #{tpu_custom_call.1} parent=1 // pred_region
      %39 = dma.done [#allocation7], 256
    $region17: #{tpu_custom_call.1} parent=1 // pred_fallthru
      _
    %p40 = scmp.eq.s32.totalorder 0, 0
    // Predicated region
    $region18: #{tpu_custom_call.1} parent=1 // pred_check
      %p41 = pneg %p40
    $region19: #{tpu_custom_call.1} parent=1 // pred_check_branch
      %43 = sbr.rel (%p41) target = $region21
    $region20: #{tpu_custom_call.1} parent=1 // pred_region
      %vm44 = vcmask 0
      %45 = vst.msk [vmem:[#allocation2] sm:$0x1] %vm44, 0.0
    $region21: #{tpu_custom_call.1} parent=1 // pred_fallthru
      _
    %v46 = vld [vmem:[#allocation3] sm:$0xff]
    %v47 = vld [vmem:[#allocation3 + $0x8] sm:$0xff]
    %v48 = vld [vmem:[#allocation6] sm:$0xff]
    %v49 = vld [vmem:[#allocation6 + $0x8] sm:$0xff]
    %v50 = vsub.f32 %v46, %v48
    %v51 = vsub.f32 %v47, %v49
    %v52 = vld [vmem:[#allocation2] sm:$0x1]
    %v53 = vmul.f32 %v50, %v50
    %v54 = vmul.f32 %v51, %v51
    %v55 = vadd.f32 %v53, %v54
    %56 = vadd.xlane.f32.xlu0 %v55
    %v57 = vpop.xlane.xlu0 %56
    %v58 = vrot.slane %v57, 4
    %v59 = vadd.f32 %v57, %v58
    %v60 = vrot.slane %v59, 2
    %v61 = vadd.f32 %v59, %v60
    %v62 = vrot.slane %v61, 1
    %v63 = vadd.f32 %v61, %v62
    %s64 = vtos %v63
    %v65 = vstv %s64
    %v66 = vadd.f32 %v52, %v65
    %vm67 = vcmask 0
    %68 = vst.msk [vmem:[#allocation2] sm:$0x1] %vm67, %v66
    // Predicated region
    $region22: #{tpu_custom_call.1} parent=1 // pred_check
      %p69 = pneg %p40
    $region23: #{tpu_custom_call.1} parent=1 // pred_check_branch
      %71 = sbr.rel (%p69) target = $region25
    $region24: #{tpu_custom_call.1} parent=1 // pred_region
      %v72 = vld [vmem:[#allocation2] sm:$0x1]
      %v73 = vmul.f32 %v72, 0.00048828125
      %74 = vst.msk [vmem:[#allocation8] sm:$0x1] %vm67, %v73
    $region25: #{tpu_custom_call.1} parent=1 // pred_fallthru
      _
    // Predicated region
    $region26: #{tpu_custom_call.1} parent=1 // pred_check
      _
    $region27: #{tpu_custom_call.1} parent=1 // pred_check_branch
      %76 = sbr.rel (0) target = $region29
    $region28: #{tpu_custom_call.1} parent=1 // pred_region
      %s78 = ssub.s32 16, 16
      %79 = vsyncadd [#allocation5], %s78
      %s81 = sshll.u32 [#allocation8], 4
      %s82 = int_to_ptr.vmem [resolvable:$true] %s81
      %84 = dma.vmem_to_hbm [thread:$0]  %s82, 16, %s2, [#allocation5]
    $region29: #{tpu_custom_call.1} parent=1 // pred_fallthru
      _
    // Predicated region
    $region30: #{tpu_custom_call.1} parent=1 // pred_check
      _
    $region31: #{tpu_custom_call.1} parent=1 // pred_check_branch
      %86 = sbr.rel (0) target = $region33
    $region32: #{tpu_custom_call.1} parent=1 // pred_region
      %87 = dma.done [#allocation5], 16
    $region33: #{tpu_custom_call.1} parent=1 // pred_fallthru
      _
    %88 = vsyncpa [#allocation4], 1
    %89 = vsyncpa [#allocation7], 1
    %90 = vsyncpa [#allocation5], 1

</llo_original>
